<compile_context>
chip_gen: v7x
topology: tpu7x:2x2x1
jax: 0.10.0
libtpu: 0.0.40
codegen_flags: <defaults>
</compile_context>

<pallas_src>
import jax
import jax.numpy as jnp
from jax.experimental import pallas as pl
from jax.experimental.pallas import tpu as pltpu

IN_FEATURES = 2
OUT_FEATURES = 3


def _linear_kernel(x_ref, p_ref, o_ref):
    # x_ref: (6, 2) f32 in VMEM
    # p_ref: (9,)   f32 in SMEM  -- layout: [W^T row-major (2x3) | bias (3)]
    #        W^T[i, j] = p_ref[3*i + j],  bias[j] = p_ref[6 + j]
    # o_ref: (6, 3) f32 in VMEM
    x = x_ref[...]          # (6, 2)
    x0 = x[:, 0:1]          # (6, 1) input feature 0
    x1 = x[:, 1:2]          # (6, 1) input feature 1
    # Three unrolled vector x scalar FMA columns (pure VPU, scalar operands
    # come from SMEM/sreg and co-issue in the scalar slot).
    for j in range(OUT_FEATURES):
        o_ref[:, j:j + 1] = x0 * p_ref[j] + x1 * p_ref[3 + j] + p_ref[6 + j]


def pack_params(weight, bias):
    """Pack Linear params ONCE at init: [W^T row-major | bias] -> (9,) f32."""
    return jnp.concatenate(
        [weight.T.reshape(-1), bias.reshape(-1)]
    ).astype(jnp.float32)


def linear_pallas(x_flat, params_flat):
    """x_flat: (12,) f32; params_flat: (9,) f32 (pre-packed) -> (6, 3) f32."""
    rows = x_flat.shape[0] // IN_FEATURES  # 12 // 2 = 6
    x2 = x_flat.reshape(rows, IN_FEATURES)
    return pl.pallas_call(
        _linear_kernel,
        out_shape=jax.ShapeDtypeStruct((rows, OUT_FEATURES), jnp.float32),
        in_specs=[
            pl.BlockSpec(memory_space=pltpu.MemorySpace.VMEM),   # activations
            pl.BlockSpec(memory_space=pltpu.MemorySpace.SMEM),   # packed params
        ],
        out_specs=pl.BlockSpec(memory_space=pltpu.MemorySpace.VMEM),
    )(x2, params_flat)


def model_forward(x, params_flat):
    # x.view(12)
    x_flat = x.reshape(12)
    # layers1(x)  (see note at top re: shape reinterpretation)
    return linear_pallas(x_flat, params_flat)


if __name__ == "__main__":
    key = jax.random.PRNGKey(0)
    k_x, k_w, k_b = jax.random.split(key, 3)

    # Deterministic parameter init mimicking nn.Linear(2, 3):
    # U(-1/sqrt(in_features), +1/sqrt(in_features))
    bound = 1.0 / jnp.sqrt(jnp.float32(IN_FEATURES))
    weight = jax.random.uniform(
        k_w, (OUT_FEATURES, IN_FEATURES), jnp.float32, -bound, bound
    )
    bias = jax.random.uniform(k_b, (OUT_FEATURES,), jnp.float32, -bound, bound)

    # Pack parameters ONCE (init-time, not on the per-call hot path).
    params_flat = jax.block_until_ready(pack_params(weight, bias))

    # Small input consistent with x.view(12): 2*3*2 = 12 elements.
    x = jax.random.normal(k_x, (2, 3, 2), dtype=jnp.float32)

    out = model_forward(x, params_flat)
    out = jax.block_until_ready(out)

    # Reference check in plain JAX.
    ref = x.reshape(12).reshape(6, 2) @ weight.T + bias
    assert out.shape == (6, OUT_FEATURES)
    assert jnp.allclose(out, ref, atol=1e-5, rtol=1e-5)

    print("KERNEL_OK")
</pallas_src>

<mosaic_0001>
module attributes {stable_mosaic.version = 11 : i64} {
  func.func @_linear_kernel(%arg0: memref<6x2xf32, #tpu.memory_space<vmem>>, %arg1: memref<9xf32, #tpu.memory_space<smem>>, %arg2: memref<6x3xf32, #tpu.memory_space<vmem>>) attributes {dimension_semantics = [], scalar_prefetch = 0 : i64, scratch_operands = 0 : i64, tpu.core_type = #tpu.core_type<tc>} {
    %c0 = arith.constant 0 : index
    %c0_0 = arith.constant 0 : index
    %0 = vector.load %arg0[%c0, %c0_0] : memref<6x2xf32, #tpu.memory_space<vmem>>, vector<6x2xf32>
    %1 = vector.extract_strided_slice %0 {offsets = [0, 0], sizes = [6, 1], strides = [1, 1]} : vector<6x2xf32> to vector<6x1xf32>
    %2 = vector.extract_strided_slice %0 {offsets = [0, 1], sizes = [6, 1], strides = [1, 1]} : vector<6x2xf32> to vector<6x1xf32>
    %c0_1 = arith.constant 0 : index
    %3 = memref.load %arg1[%c0_1] : memref<9xf32, #tpu.memory_space<smem>>
    %4 = vector.broadcast %3 : f32 to vector<6x1xf32>
    %5 = arith.mulf %1, %4 : vector<6x1xf32>
    %c3 = arith.constant 3 : index
    %6 = memref.load %arg1[%c3] : memref<9xf32, #tpu.memory_space<smem>>
    %7 = vector.broadcast %6 : f32 to vector<6x1xf32>
    %8 = arith.mulf %2, %7 : vector<6x1xf32>
    %9 = arith.addf %5, %8 : vector<6x1xf32>
    %c6 = arith.constant 6 : index
    %10 = memref.load %arg1[%c6] : memref<9xf32, #tpu.memory_space<smem>>
    %11 = vector.broadcast %10 : f32 to vector<6x1xf32>
    %12 = arith.addf %9, %11 : vector<6x1xf32>
    %c0_2 = arith.constant 0 : index
    %c0_3 = arith.constant 0 : index
    %13 = vector.load %arg2[%c0_2, %c0_3] : memref<6x3xf32, #tpu.memory_space<vmem>>, vector<6x1xf32>
    tpu.vector_store %arg2[%c0_2, %c0_3], %12 {strides = array<i32>} : memref<6x3xf32, #tpu.memory_space<vmem>>, vector<6x1xf32>,
    %c1 = arith.constant 1 : index
    %14 = memref.load %arg1[%c1] : memref<9xf32, #tpu.memory_space<smem>>
    %15 = vector.broadcast %14 : f32 to vector<6x1xf32>
    %16 = arith.mulf %1, %15 : vector<6x1xf32>
    %c4 = arith.constant 4 : index
    %17 = memref.load %arg1[%c4] : memref<9xf32, #tpu.memory_space<smem>>
    %18 = vector.broadcast %17 : f32 to vector<6x1xf32>
    %19 = arith.mulf %2, %18 : vector<6x1xf32>
    %20 = arith.addf %16, %19 : vector<6x1xf32>
    %c7 = arith.constant 7 : index
    %21 = memref.load %arg1[%c7] : memref<9xf32, #tpu.memory_space<smem>>
    %22 = vector.broadcast %21 : f32 to vector<6x1xf32>
    %23 = arith.addf %20, %22 : vector<6x1xf32>
    %c0_4 = arith.constant 0 : index
    %c1_5 = arith.constant 1 : index
    %24 = vector.load %arg2[%c0_4, %c1_5] : memref<6x3xf32, #tpu.memory_space<vmem>>, vector<6x1xf32>
    tpu.vector_store %arg2[%c0_4, %c1_5], %23 {strides = array<i32>} : memref<6x3xf32, #tpu.memory_space<vmem>>, vector<6x1xf32>,
    %c2 = arith.constant 2 : index
    %25 = memref.load %arg1[%c2] : memref<9xf32, #tpu.memory_space<smem>>
    %26 = vector.broadcast %25 : f32 to vector<6x1xf32>
    %27 = arith.mulf %1, %26 : vector<6x1xf32>
    %c5 = arith.constant 5 : index
    %28 = memref.load %arg1[%c5] : memref<9xf32, #tpu.memory_space<smem>>
    %29 = vector.broadcast %28 : f32 to vector<6x1xf32>
    %30 = arith.mulf %2, %29 : vector<6x1xf32>
    %31 = arith.addf %27, %30 : vector<6x1xf32>
    %c8 = arith.constant 8 : index
    %32 = memref.load %arg1[%c8] : memref<9xf32, #tpu.memory_space<smem>>
    %33 = vector.broadcast %32 : f32 to vector<6x1xf32>
    %34 = arith.addf %31, %33 : vector<6x1xf32>
    %c0_6 = arith.constant 0 : index
    %c2_7 = arith.constant 2 : index
    %35 = vector.load %arg2[%c0_6, %c2_7] : memref<6x3xf32, #tpu.memory_space<vmem>>, vector<6x1xf32>
    tpu.vector_store %arg2[%c0_6, %c2_7], %34 {strides = array<i32>} : memref<6x3xf32, #tpu.memory_space<vmem>>, vector<6x1xf32>,
    return
  }
}

</mosaic_0001>

<llo_original>
// kernel: tpu_custom_call.1
$region0: #{tpu_custom_call.1}
  #allocation0 [shape = 'u32[]', space=smem, size = 0x4, offset = 0x4, fixed_abs, tag = 'smem constant byte address 0x4 - core index']
  #allocation1 [shape = 'u32[144,128]{1,0:T(1,128)}', space=vmem, size = 0x12000, scoped, tag = 'internal scratch']
  %s0 = inlined_call_operand.vmem [shape: f32[6,2], index: 0, kind: input, shape index: {}]
  %s1 = inlined_call_operand.vmem [shape: f32[9], index: 1, kind: input, shape index: {}]
  %s2 = inlined_call_operand.vmem [shape: f32[6,3], index: 2, kind: output, shape index: {}]
  %s3 = sld [smem:[#allocation0]]
  $region22: #{tpu_custom_call.1} parent=0
    _
  %s5 = ssub.s32 1, %s3
  %s6 = scalar_select 0, %s5, %s3
  $region1: #{tpu_custom_call.1} parent=0
    #allocation2 [shape = 'u8[512]{0}', space=smem, size = 0x200, scoped, tag = 'input window, operand 1, single buffered']
    #allocation3 [shape = 's32[1]{0}', space=sflag, size = 0x4, scoped, tag = 'scoped memory for tpu_custom_call.1']
    %7 = vsyncpa [#allocation3], 0
    // Predicated region
    $region2: #{tpu_custom_call.1} parent=1 // pred_check
      _
    $region3: #{tpu_custom_call.1} parent=1 // pred_check_branch
      %9 = sbr.rel (0) target = $region5
    $region4: #{tpu_custom_call.1} parent=1 // pred_region
      _
    $region5: #{tpu_custom_call.1} parent=1 // pred_fallthru
      _
    // Predicated region
    $region6: #{tpu_custom_call.1} parent=1 // pred_check
      _
    $region7: #{tpu_custom_call.1} parent=1 // pred_check_branch
      %11 = sbr.rel (0) target = $region9
    $region8: #{tpu_custom_call.1} parent=1 // pred_region
      %s13 = ssub.s32 16, 16
      %14 = vsyncadd [#allocation3], %s13
      %s16 = sshll.u32 %s1, 4
      %s17 = int_to_ptr.vmem [resolvable:$true] %s16
      %19 = dma.vmem_to_smem %s17, 16, [#allocation2], [#allocation3]
    $region9: #{tpu_custom_call.1} parent=1 // pred_fallthru
      _
    // Predicated region
    $region10: #{tpu_custom_call.1} parent=1 // pred_check
      _
    $region11: #{tpu_custom_call.1} parent=1 // pred_check_branch
      %21 = sbr.rel (0) target = $region13
    $region12: #{tpu_custom_call.1} parent=1 // pred_region
      %22 = dma.done [#allocation3], 16
    $region13: #{tpu_custom_call.1} parent=1 // pred_fallthru
      _
    %23 = sfence
    %v24 = vld [vmem:[%s0] sm:$0x3f]
    %s25 = sld [smem:[#allocation2]]
    %v26 = vstv %s25
    %v27 = vmul.f32 %v24, %v26
    %s28 = sld [smem:[#allocation2 + $0x3]]
    %v29 = vstv %s28
    %v30 = vmul.f32 %v24, %v29
    %32 = vrot.lane.b32.xlu0 %v30, 127
    %v33 = vpop.permute.xlu0 %32
    %v35 = vadd.f32 %v27, %v33
    %s36 = sld [smem:[#allocation2 + $0x6]]
    %v37 = vstv %s36
    %v38 = vadd.f32 %v35, %v37
    %vm39 = vcmask 5120
    %40 = vst.msk [vmem:[%s2] sm:$0x3f] %vm39, %v38
    %s41 = sld [smem:[#allocation2 + $0x1]]
    %v42 = vstv %s41
    %v43 = vmul.f32 %v24, %v42
    %s44 = sld [smem:[#allocation2 + $0x4]]
    %v45 = vstv %s44
    %v46 = vmul.f32 %v24, %v45
    %48 = vrot.lane.b32.xlu0 %v46, 127
    %v49 = vpop.permute.xlu0 %48
    %v51 = vadd.f32 %v43, %v49
    %s52 = sld [smem:[#allocation2 + $0x7]]
    %v53 = vstv %s52
    %v54 = vadd.f32 %v51, %v53
    %56 = vrot.lane.b32.xlu0 %v54, 1
    %v57 = vpop.permute.xlu0 %56
    %vm59 = vcmask 13320
    %60 = vst.msk [vmem:[%s2] sm:$0x3f] %vm59, %v57
    %s61 = sld [smem:[#allocation2 + $0x2]]
    %v62 = vstv %s61
    %v63 = vmul.f32 %v24, %v62
    %s64 = sld [smem:[#allocation2 + $0x5]]
    %v65 = vstv %s64
    %v66 = vmul.f32 %v24, %v65
    %68 = vrot.lane.b32.xlu0 %v66, 127
    %v69 = vpop.permute.xlu0 %68
    %v71 = vadd.f32 %v63, %v69
    %s72 = sld [smem:[#allocation2 + $0x8]]
    %v73 = vstv %s72
    %v74 = vadd.f32 %v71, %v73
    %76 = vrot.lane.b32.xlu0 %v74, 2
    %v77 = vpop.permute.xlu0 %76
    %vm79 = vcmask 21520
    %80 = vst.msk [vmem:[%s2] sm:$0x3f] %vm79, %v77
    // Predicated region
    $region14: #{tpu_custom_call.1} parent=1 // pred_check
      _
    $region15: #{tpu_custom_call.1} parent=1 // pred_check_branch
      %82 = sbr.rel (0) target = $region17
    $region16: #{tpu_custom_call.1} parent=1 // pred_region
      _
    $region17: #{tpu_custom_call.1} parent=1 // pred_fallthru
      _
    // Predicated region
    $region18: #{tpu_custom_call.1} parent=1 // pred_check
      _
    $region19: #{tpu_custom_call.1} parent=1 // pred_check_branch
      %84 = sbr.rel (0) target = $region21
    $region20: #{tpu_custom_call.1} parent=1 // pred_region
      _
    $region21: #{tpu_custom_call.1} parent=1 // pred_fallthru
      _
    %85 = vsyncpa [#allocation3], 1

</llo_original>
